<compile_context>
chip_gen: v7x
topology: tpu7x:2x2x1
jax: 0.10.0
libtpu: 0.0.40
codegen_flags: <defaults>
</compile_context>

<pallas_src>
import functools

import jax
import jax.numpy as jnp
from jax.experimental import pallas as pl
from jax.experimental.pallas import tpu as pltpu

_LANE = 128      # lane width (last dim)
_SUBLANE = 8     # sublane width (second-to-last dim)
_MAX_TM = 256
_MAX_TN = 512    # multiple of 256 -> MXU-native on v6e/v7x, 128-aligned for v5e
_MAX_TK = 512


def _round_up(x, m):
    return (x + m - 1) // m * m


def _largest_divisor_tile(dim, quantum, target):
    """Largest multiple of `quantum` that divides `dim` (itself a multiple of
    `quantum`) and is <= target."""
    if dim <= target:
        return dim
    t = (target // quantum) * quantum
    while t > quantum and dim % t != 0:
        t -= quantum
    return t if dim % t == 0 else quantum


def _linear_kernel(x_ref, w_ref, b_ref, o_ref, acc_ref):
    # x_ref: (tm, tk) bf16, w_ref: (tk, tn) bf16 (already W^T), b_ref: (1, tn) f32
    k = pl.program_id(2)

    @pl.when(k == 0)
    def _():
        acc_ref[...] = jnp.zeros_like(acc_ref)

    acc_ref[...] += jnp.dot(
        x_ref[...], w_ref[...], preferred_element_type=jnp.float32
    )

    @pl.when(k == pl.num_programs(2) - 1)
    def _():
        # f32 bias add, then cast once; lane-dense (tn % 128 == 0) store.
        o_ref[...] = (acc_ref[...] + b_ref[...]).astype(o_ref.dtype)


@functools.partial(
    jax.jit, static_argnames=("tm", "tn", "tk", "m_pad", "n_out")
)
def _linear_call(x, wt, b, *, tm, tn, tk, m_pad, n_out):
    """Computes (x @ wt + b)[:, :n_out] with wt (K, N_pad) pre-transposed/padded."""
    M, K = x.shape
    n_pad = wt.shape[1]
    out_dtype = x.dtype

    xb = x.astype(wt.dtype)                       # bf16 activations for the MXU
    if m_pad != M:
        xb = jnp.pad(xb, ((0, m_pad - M), (0, 0)))

    grid = (m_pad // tm, n_pad // tn, pl.cdiv(K, tk))

    y = pl.pallas_call(
        _linear_kernel,
        out_shape=jax.ShapeDtypeStruct((m_pad, n_pad), out_dtype),
        grid_spec=pltpu.PrefetchScalarGridSpec(
            num_scalar_prefetch=0,
            grid=grid,
            in_specs=[
                pl.BlockSpec((tm, tk), lambda i, j, k: (i, k)),
                pl.BlockSpec((tk, tn), lambda i, j, k: (k, j)),
                pl.BlockSpec((1, tn), lambda i, j, k: (0, j)),
            ],
            out_specs=pl.BlockSpec((tm, tn), lambda i, j, k: (i, j)),
            scratch_shapes=[pltpu.VMEM((tm, tn), jnp.float32)],
        ),
        compiler_params=pltpu.CompilerParams(
            dimension_semantics=("parallel", "parallel", "arbitrary"),
            vmem_limit_bytes=32 * 1024 * 1024,   # explicit, safe on v5e/v6e/v7x
        ),
    )(xb, wt, b)

    return y[:M, :n_out]


class FineTuningModelSubNet:
    """JAX/Pallas port of the PyTorch module (one Linear head per output_dim)."""

    def __init__(self, input_dim, output_dims, key, param_dtype=jnp.bfloat16):
        self.input_dim = input_dim
        self.params = {}
        bound = float(input_dim) ** -0.5
        for output_dim in output_dims:
            key, wk, bk = jax.random.split(key, 3)
            # nn.Linear-style uniform(-1/sqrt(fan_in), 1/sqrt(fan_in)) init.
            w = jax.random.uniform(
                wk, (output_dim, input_dim), jnp.float32, -bound, bound
            )
            b = jax.random.uniform(bk, (output_dim,), jnp.float32, -bound, bound)

            # Pre-transpose to (D_in, D_out) and zero-pad D_out up to a lane
            # multiple so the kernel's output store is lane-dense & unmasked.
            n_pad = _round_up(output_dim, _LANE)
            wt = jnp.zeros((input_dim, n_pad), jnp.float32)
            wt = wt.at[:, :output_dim].set(w.T)
            bp = jnp.zeros((1, n_pad), jnp.float32)
            bp = bp.at[0, :output_dim].set(b)

            self.params[str(output_dim)] = {
                "wt": wt.astype(param_dtype),   # (D_in, N_pad) bf16, pre-transposed
                "b": bp,                        # (1, N_pad) f32 bias
                "n_out": output_dim,
            }
        # TODO(synk): if many heads share the same x per step, fuse them into a
        # single (D_in, sum(N_pad)) weight to amortize dispatch/DMA overhead.

    def forward(self, input_data, output_dim):
        p = self.params[str(output_dim)]
        M, K = input_data.shape
        assert K == self.input_dim
        n_pad = p["wt"].shape[1]

        # Static tile selection (generation-safe: tiles stay well under VMEM).
        m_pad = _round_up(M, _SUBLANE)
        if m_pad > _MAX_TM:
            m_pad = _round_up(M, _MAX_TM)
            tm = _MAX_TM
        else:
            tm = m_pad
        tn = _largest_divisor_tile(n_pad, _LANE, _MAX_TN)
        if K <= _MAX_TK or K % _LANE != 0:
            tk = K            # full-extent K block (no K padding needed)
        else:
            tk = _largest_divisor_tile(K, _LANE, _MAX_TK)

        return _linear_call(
            input_data, p["wt"], p["b"],
            tm=tm, tn=tn, tk=tk, m_pad=m_pad, n_out=p["n_out"],
        )

    __call__ = forward


if __name__ == "__main__":
    key = jax.random.PRNGKey(0)
    key, pkey, xkey = jax.random.split(key, 3)

    batch = 8
    input_dim = 32
    output_dims = [16, 64]

    model = FineTuningModelSubNet(input_dim, output_dims, pkey)
    x = jax.random.normal(xkey, (batch, input_dim), jnp.float32)

    for od in output_dims:
        y = model(x, od)
        y = jax.block_until_ready(y)
        assert y.shape == (batch, od), y.shape

        # Reference in plain JAX using the exact stored (bf16) parameters.
        p = model.params[str(od)]
        wt_f32 = p["wt"].astype(jnp.float32)[:, :od]
        b_f32 = p["b"][0, :od]
        x_f32 = x.astype(p["wt"].dtype).astype(jnp.float32)
        y_ref = x_f32 @ wt_f32 + b_f32
        assert jnp.allclose(y, y_ref, atol=1e-4, rtol=1e-4), (
            float(jnp.max(jnp.abs(y - y_ref)))
        )

    print("KERNEL_OK")
</pallas_src>

<mosaic_0001>
module attributes {stable_mosaic.version = 11 : i64} {
  func.func @_linear_kernel(%arg0: i32, %arg1: i32, %arg2: i32, %arg3: memref<8x32xbf16, #tpu.memory_space<vmem>>, %arg4: memref<32x128xbf16, #tpu.memory_space<vmem>>, %arg5: memref<1x128xf32, #tpu.memory_space<vmem>>, %arg6: memref<8x128xf32, #tpu.memory_space<vmem>>, %arg7: memref<8x128xf32, #tpu.memory_space<vmem>>) attributes {dimension_semantics = [#tpu.dimension_semantics<parallel>, #tpu.dimension_semantics<parallel>, #tpu.dimension_semantics<arbitrary>], iteration_bounds = array<i64: 1, 1, 1>, scalar_prefetch = 0 : i64, scratch_operands = 1 : i64, tpu.core_type = #tpu.core_type<tc>, window_params = [{transform_indices = @transform_0, window_bounds = array<i64: 8, 32>}, {transform_indices = @transform_1, window_bounds = array<i64: 32, 128>}, {transform_indices = @transform_2, window_bounds = array<i64: 1, 128>}, {transform_indices = @transform_3, window_bounds = array<i64: 8, 128>}]} {
    %c0_i32 = arith.constant 0 : i32
    %0 = arith.cmpi eq, %arg2, %c0_i32 : i32
    %1 = arith.extui %0 : i1 to i32
    %c0_i32_0 = arith.constant 0 : i32
    %2 = arith.cmpi ne, %1, %c0_i32_0 : i32
    scf.if %2 {
      %cst_10 = arith.constant 0.000000e+00 : f32
      %12 = vector.broadcast %cst_10 : f32 to vector<8x128xf32>
      %c0_11 = arith.constant 0 : index
      %c0_12 = arith.constant 0 : index
      %13 = vector.load %arg7[%c0_11, %c0_12] : memref<8x128xf32, #tpu.memory_space<vmem>>, vector<8x128xf32>
      tpu.vector_store %arg7[%c0_11, %c0_12], %12 {strides = array<i32>} : memref<8x128xf32, #tpu.memory_space<vmem>>, vector<8x128xf32>,
    } else {
    }
    %c0 = arith.constant 0 : index
    %c0_1 = arith.constant 0 : index
    %3 = vector.load %arg7[%c0, %c0_1] : memref<8x128xf32, #tpu.memory_space<vmem>>, vector<8x128xf32>
    %c0_2 = arith.constant 0 : index
    %c0_3 = arith.constant 0 : index
    %4 = vector.load %arg3[%c0_2, %c0_3] : memref<8x32xbf16, #tpu.memory_space<vmem>>, vector<8x32xbf16>
    %c0_4 = arith.constant 0 : index
    %c0_5 = arith.constant 0 : index
    %5 = vector.load %arg4[%c0_4, %c0_5] : memref<32x128xbf16, #tpu.memory_space<vmem>>, vector<32x128xbf16>
    %cst = arith.constant dense<0.000000e+00> : vector<8x128xf32>
    %6 = tpu.matmul %4, %5, %cst {dimension_numbers = #tpu.dot_dimension_numbers<[1], [0], [0], [1], [0, 0, 1, 1], [], []>} : vector<8x32xbf16>, vector<32x128xbf16>, vector<8x128xf32> -> vector<8x128xf32>
    %7 = arith.addf %3, %6 : vector<8x128xf32>
    %c0_6 = arith.constant 0 : index
    %c0_7 = arith.constant 0 : index
    %8 = vector.load %arg7[%c0_6, %c0_7] : memref<8x128xf32, #tpu.memory_space<vmem>>, vector<8x128xf32>
    tpu.vector_store %arg7[%c0_6, %c0_7], %7 {strides = array<i32>} : memref<8x128xf32, #tpu.memory_space<vmem>>, vector<8x128xf32>,
    %c0_i32_8 = arith.constant 0 : i32
    %9 = arith.cmpi eq, %arg2, %c0_i32_8 : i32
    %10 = arith.extui %9 : i1 to i32
    %c0_i32_9 = arith.constant 0 : i32
    %11 = arith.cmpi ne, %10, %c0_i32_9 : i32
    scf.if %11 {
      %c0_10 = arith.constant 0 : index
      %c0_11 = arith.constant 0 : index
      %12 = vector.load %arg7[%c0_10, %c0_11] : memref<8x128xf32, #tpu.memory_space<vmem>>, vector<8x128xf32>
      %c0_12 = arith.constant 0 : index
      %c0_13 = arith.constant 0 : index
      %13 = vector.load %arg5[%c0_12, %c0_13] : memref<1x128xf32, #tpu.memory_space<vmem>>, vector<1x128xf32>
      %14 = vector.broadcast %13 : vector<1x128xf32> to vector<8x128xf32>
      %15 = arith.addf %12, %14 : vector<8x128xf32>
      %c0_14 = arith.constant 0 : index
      %c0_15 = arith.constant 0 : index
      %16 = vector.load %arg6[%c0_14, %c0_15] : memref<8x128xf32, #tpu.memory_space<vmem>>, vector<8x128xf32>
      tpu.vector_store %arg6[%c0_14, %c0_15], %15 {strides = array<i32>} : memref<8x128xf32, #tpu.memory_space<vmem>>, vector<8x128xf32>,
    } else {
    }
    return
  }
  func.func @transform_0(%arg0: i32, %arg1: i32, %arg2: i32) -> (i32, i32) {
    %c0_i32 = arith.constant 0 : i32
    return %arg0, %arg2 : i32, i32
  }
  func.func @transform_1(%arg0: i32, %arg1: i32, %arg2: i32) -> (i32, i32) {
    %c0_i32 = arith.constant 0 : i32
    return %arg2, %arg1 : i32, i32
  }
  func.func @transform_2(%arg0: i32, %arg1: i32, %arg2: i32) -> (i32, i32) {
    %c0_i32 = arith.constant 0 : i32
    %c0_i32_0 = arith.constant 0 : i32
    return %c0_i32, %arg1 : i32, i32
  }
  func.func @transform_3(%arg0: i32, %arg1: i32, %arg2: i32) -> (i32, i32) {
    %c0_i32 = arith.constant 0 : i32
    return %arg0, %arg1 : i32, i32
  }
}

</mosaic_0001>

<llo_original>
// kernel: _linear_call.1
$region0: #{_linear_call.1}
  #allocation0 [shape = 'u32[]', space=smem, size = 0x4, offset = 0x4, fixed_abs, tag = 'smem constant byte address 0x4 - core index']
  #allocation1 [shape = 'u32[144,128]{1,0:T(1,128)}', space=vmem, size = 0x12000, scoped, tag = 'internal scratch']
  #allocation2 [shape = 'f32[8,128]{1,0:T(8,128)}', space=vmem, size = 0x1000, scoped, tag = 'scratch operand']
  %s0 = inlined_call_operand.vmem [shape: bf16[8,32], index: 0, kind: input, shape index: {}]
  %s1 = inlined_call_operand.hbm [shape: bf16[32,128], index: 1, kind: input, shape index: {}]
  %s2 = inlined_call_operand.vmem [shape: f32[1,128], index: 2, kind: input, shape index: {}]
  %s3 = inlined_call_operand.hbm [shape: f32[8,128], index: 3, kind: output, shape index: {}]
  %s4 = sld [smem:[#allocation0]]
  $region34: #{_linear_call.1} parent=0
    _
  %s6 = ssub.s32 1, %s4
  %s7 = scalar_select 0, %s6, %s4
  $region1: #{_linear_call.1} parent=0
    #allocation3 [shape = 'u8[8192]{0}', space=vmem, size = 0x2000, scoped, tag = 'input window, operand 1, single buffered']
    #allocation4 [shape = 's32[1]{0}', space=sflag, size = 0x4, scoped, tag = 'scoped memory for _linear_call.1']
    #allocation5 [shape = 's32[1]{0}', space=sflag, size = 0x4, scoped, tag = 'scoped memory for _linear_call.1']
    #allocation6 [shape = 'u8[4096]{0}', space=vmem, size = 0x1000, scoped, tag = 'output window, operand 0, single buffered']
    %8 = vsyncpa [#allocation4], 0
    %9 = vsyncpa [#allocation5], 0
    // Predicated region
    $region2: #{_linear_call.1} parent=1 // pred_check
      _
    $region3: #{_linear_call.1} parent=1 // pred_check_branch
      %11 = sbr.rel (0) target = $region5
    $region4: #{_linear_call.1} parent=1 // pred_region
      _
    $region5: #{_linear_call.1} parent=1 // pred_fallthru
      _
    // Predicated region
    $region6: #{_linear_call.1} parent=1 // pred_check
      _
    $region7: #{_linear_call.1} parent=1 // pred_check_branch
      %13 = sbr.rel (0) target = $region9
    $region8: #{_linear_call.1} parent=1 // pred_region
      %s15 = ssub.s32 256, 256
      %16 = vsyncadd [#allocation4], %s15
      %s17 = sshll.u32 [#allocation3], 4
      %s18 = int_to_ptr.vmem [resolvable:$true] %s17
      %23 = dma.hbm_to_vmem [thread:$0]  %s1, 256, %s18, [#allocation4], 64, 64, 4
    $region9: #{_linear_call.1} parent=1 // pred_fallthru
      _
    // Predicated region
    $region10: #{_linear_call.1} parent=1 // pred_check
      _
    $region11: #{_linear_call.1} parent=1 // pred_check_branch
      %25 = sbr.rel (0) target = $region13
    $region12: #{_linear_call.1} parent=1 // pred_region
      _
    $region13: #{_linear_call.1} parent=1 // pred_fallthru
      _
    // Predicated region
    $region14: #{_linear_call.1} parent=1 // pred_check
      _
    $region15: #{_linear_call.1} parent=1 // pred_check_branch
      %27 = sbr.rel (0) target = $region17
    $region16: #{_linear_call.1} parent=1 // pred_region
      %28 = dma.done [#allocation4], 256
    $region17: #{_linear_call.1} parent=1 // pred_fallthru
      _
    %p30 = scmp.eq.s32.totalorder 0, 0
    // Predicated region
    $region18: #{_linear_call.1} parent=1 // pred_check
      %p31 = pneg %p30
    $region19: #{_linear_call.1} parent=1 // pred_check_branch
      %33 = sbr.rel (%p31) target = $region21
    $region20: #{_linear_call.1} parent=1 // pred_region
      %34 = vst [vmem:[#allocation2] sm:$0xff] 0.0
    $region21: #{_linear_call.1} parent=1 // pred_fallthru
      _
    %v35 = vld [vmem:[#allocation2] sm:$0xff]
    %v36 = vld [vmem:[%s0] sm:$0xf]
    %v37 = vld [vmem:[#allocation3] sm:$0xf]
    %v38 = vld [vmem:[#allocation3 + $0x4] sm:$0xf]
    %v39 = vld [vmem:[#allocation3 + $0x8] sm:$0xf]
    %v40 = vld [vmem:[#allocation3 + $0xc] sm:$0xf]
    %v45 = vunpack.c.l.b16 %v37
    %v46 = vunpack.c.l.b16 %v38
    %v47 = vunpack.c.l.b16 %v39
    %v48 = vunpack.c.l.b16 %v40
    %v49 = vpack.c.b16 %v46, %v45
    %v50 = vpack.c.b16 %v48, %v47
    %vm53 = vcmask 261120
    %v55 = vsel %vm53, %v36, 0
    %57 = vmatprep.subr.bf16.mxu0 0
    %58 = vmatpush1.bf16.msra.mxu0 %v49
    %59 = vmatprep.subr.bf16.mxu0 0
    %60 = vmatpush1.bf16.msra.mxu0 %v50
    %61 = vmatprep.subr.bf16.mxu0 0
    %62 = vmatpush1.bf16.msra.mxu0 0
    %63 = vmatprep.subr.bf16.mxu0 0
    %64 = vmatpush1.bf16.msra.mxu0 0
    %65 = vmatprep.subr.bf16.mxu0 0
    %66 = vmatpush1.bf16.msra.mxu0 0
    %67 = vmatprep.subr.bf16.mxu0 0
    %68 = vmatpush1.bf16.msra.mxu0 0
    %69 = vmatprep.subr.bf16.mxu0 0
    %70 = vmatpush1.bf16.msra.mxu0 0
    %71 = vmatprep.subr.bf16.mxu0 0
    %72 = vmatpush1.bf16.msra.mxu0 0
    %73 = vmatprep.subr.bf16.mxu0 0
    %74 = vmatpush1.bf16.msra.mxu0 0
    %75 = vmatprep.subr.bf16.mxu0 0
    %76 = vmatpush1.bf16.msra.mxu0 0
    %77 = vmatprep.subr.bf16.mxu0 0
    %78 = vmatpush1.bf16.msra.mxu0 0
    %79 = vmatprep.subr.bf16.mxu0 0
    %80 = vmatpush1.bf16.msra.mxu0 0
    %81 = vmatprep.subr.bf16.mxu0 0
    %82 = vmatpush1.bf16.msra.mxu0 0
    %83 = vmatprep.subr.bf16.mxu0 0
    %84 = vmatpush1.bf16.msra.mxu0 0
    %85 = vmatprep.subr.bf16.mxu0 0
    %86 = vmatpush1.bf16.msra.mxu0 0
    %87 = vmatprep.subr.bf16.mxu0 0
    %88 = vmatpush1.bf16.msra.mxu0 0
    %89 = vmatprep.mubr.bf16.mxu0 0
    %90 = vmatmul.mubr.bf16.gmra.mrb[0].mxu0 %v55
    %v91 = vpop.f32.mrb[0].mxu0
    %v92 = vadd.f32 0.0, %v91
    %v93 = vpop.f32.mrb[0].mxu0
    %v94 = vpop.f32.mrb[0].mxu0
    %v95 = vpop.f32.mrb[0].mxu0
    %96 = vdwg.mxu0
    %v97 = vadd.f32 %v35, %v92
    %98 = vst [vmem:[#allocation2] sm:$0xff] %v97
    // Predicated region
    $region22: #{_linear_call.1} parent=1 // pred_check
      %p99 = pneg %p30
    $region23: #{_linear_call.1} parent=1 // pred_check_branch
      %101 = sbr.rel (%p99) target = $region25
    $region24: #{_linear_call.1} parent=1 // pred_region
      %v102 = vld [vmem:[#allocation2] sm:$0xff]
      %v103 = vld [vmem:[%s2] sm:$0x1]
      %v105 = vlaneseq
      %v106 = vshrl.u32 %v105, 7
      %v107 = vsub.s32 0, %v106
      %v108 = vrot.slane %v103, %v107
      %v110 = vadd.f32 %v102, %v108
      %111 = vst [vmem:[#allocation6] sm:$0xff] %v110
    $region25: #{_linear_call.1} parent=1 // pred_fallthru
      _
    // Predicated region
    $region26: #{_linear_call.1} parent=1 // pred_check
      _
    $region27: #{_linear_call.1} parent=1 // pred_check_branch
      %113 = sbr.rel (0) target = $region29
    $region28: #{_linear_call.1} parent=1 // pred_region
      %s115 = ssub.s32 128, 128
      %116 = vsyncadd [#allocation5], %s115
      %s118 = sshll.u32 [#allocation6], 4
      %s119 = int_to_ptr.vmem [resolvable:$true] %s118
      %121 = dma.vmem_to_hbm [thread:$0]  %s119, 128, %s3, [#allocation5]
    $region29: #{_linear_call.1} parent=1 // pred_fallthru
      _
    // Predicated region
    $region30: #{_linear_call.1} parent=1 // pred_check
      _
    $region31: #{_linear_call.1} parent=1 // pred_check_branch
      %123 = sbr.rel (0) target = $region33
    $region32: #{_linear_call.1} parent=1 // pred_region
      %124 = dma.done [#allocation5], 128
    $region33: #{_linear_call.1} parent=1 // pred_fallthru
      _
    %125 = vsyncpa [#allocation4], 1
    %126 = vsyncpa [#allocation5], 1

</llo_original>
